<compile_context>
chip_gen: v7x
topology: tpu7x:2x2x1
jax: 0.10.0
libtpu: 0.0.40
codegen_flags: <defaults>
</compile_context>

<pallas_src>
import functools

import jax
import jax.numpy as jnp
from jax.experimental import pallas as pl
from jax.experimental.pallas import tpu as pltpu

_LN_EPS = 1e-5


# ------------------------------- LSTM kernel ---------------------------------

def _lstm_kernel(x_ref, g_ref, bta_ref, wih_ref, whh_ref, b_ref,
                 h_out_ref, h_sc, c_sc, *, normalize: bool, matmul_dtype):
    t = pl.program_id(0)

    @pl.when(t == 0)
    def _():
        h_sc[...] = jnp.zeros_like(h_sc)
        c_sc[...] = jnp.zeros_like(c_sc)

    x = x_ref[0].astype(jnp.float32)                      # (B, S)
    if normalize:
        mean = jnp.mean(x, axis=-1, keepdims=True)
        var = jnp.mean((x - mean) ** 2, axis=-1, keepdims=True)
        x = (x - mean) * jax.lax.rsqrt(var + _LN_EPS)
        x = x * g_ref[...] + bta_ref[...]

    h_prev = h_sc[...]
    c_prev = c_sc[...]
    H = h_sc.shape[-1]

    # PyTorch gate order: i, f, g, o.  bf16 MXU operands, f32 accumulation.
    gates = (jnp.dot(x.astype(matmul_dtype), wih_ref[...],
                     preferred_element_type=jnp.float32)
             + jnp.dot(h_prev.astype(matmul_dtype), whh_ref[...],
                       preferred_element_type=jnp.float32)
             + b_ref[...])                                # (B, 4H) f32

    i_g = jax.nn.sigmoid(gates[:, 0 * H:1 * H])
    f_g = jax.nn.sigmoid(gates[:, 1 * H:2 * H])
    g_g = jnp.tanh(gates[:, 2 * H:3 * H])
    o_g = jax.nn.sigmoid(gates[:, 3 * H:4 * H])

    c_new = f_g * c_prev + i_g * g_g
    h_new = o_g * jnp.tanh(c_new)
    c_sc[...] = c_new
    h_sc[...] = h_new

    @pl.when(t == pl.num_programs(0) - 1)
    def _():
        h_out_ref[...] = h_new.astype(h_out_ref.dtype)


def _lstm_forward(states, gamma_s, beta_s, w_ih, w_hh, b, *, normalize,
                  matmul_dtype):
    B, T, S = states.shape
    H = w_hh.shape[0]
    states_t = jnp.transpose(states, (1, 0, 2)).astype(jnp.float32)  # (T, B, S)

    kernel = functools.partial(_lstm_kernel, normalize=normalize,
                               matmul_dtype=matmul_dtype)

    def resident(shape):
        return pl.BlockSpec(shape, lambda t: tuple(0 for _ in shape))

    return pl.pallas_call(
        kernel,
        out_shape=jax.ShapeDtypeStruct((B, H), jnp.float32),
        grid_spec=pltpu.PrefetchScalarGridSpec(
            num_scalar_prefetch=0,
            grid=(T,),
            in_specs=[
                pl.BlockSpec((1, B, S), lambda t: (t, 0, 0)),   # x_t (pipelined)
                resident((1, S)),                               # LN gamma (states)
                resident((1, S)),                               # LN beta  (states)
                resident((S, 4 * H)),                           # W_ih (in, 4H)
                resident((H, 4 * H)),                           # W_hh (H, 4H)
                resident((1, 4 * H)),                           # fused bias
            ],
            out_specs=pl.BlockSpec((B, H), lambda t: (0, 0)),
            scratch_shapes=[pltpu.VMEM((B, H), jnp.float32),    # h carry
                            pltpu.VMEM((B, H), jnp.float32)],   # c carry
        ),
        compiler_params=pltpu.CompilerParams(
            dimension_semantics=("arbitrary",)),
    )(states_t, gamma_s, beta_s,
      w_ih.astype(matmul_dtype), w_hh.astype(matmul_dtype),
      b.astype(jnp.float32))


# -------------------------------- MLP kernel ---------------------------------

def _mlp_kernel(s_ref, a_ref, gs_ref, bs_ref, ga_ref, ba_ref,
                w1s_ref, w1a_ref, b1_ref, w2_ref, b2_ref, w3_ref, b3_ref,
                o_ref, *, normalize: bool, tanh: bool, matmul_dtype):
    s = s_ref[0].astype(jnp.float32)          # (1, Hs)
    a = a_ref[0].astype(jnp.float32)          # (N, A)
    N = a.shape[0]
    Hs = s.shape[-1]
    din = Hs + a.shape[-1]

    s_bc = jnp.broadcast_to(s, (N, Hs))       # broadcast lives in VMEM/vregs only

    if normalize:
        # LayerNorm over the virtual concat [state, action] without forming it.
        mean = (jnp.sum(s_bc, axis=-1, keepdims=True)
                + jnp.sum(a, axis=-1, keepdims=True)) / din
        ds = s_bc - mean
        da = a - mean
        var = (jnp.sum(ds * ds, axis=-1, keepdims=True)
               + jnp.sum(da * da, axis=-1, keepdims=True)) / din
        rstd = jax.lax.rsqrt(var + _LN_EPS)
        xs = ds * rstd * gs_ref[...] + bs_ref[...]
        xa = da * rstd * ga_ref[...] + ba_ref[...]
    else:
        xs = s_bc
        xa = a

    # input_layer (+ReLU): split matmul, no concat ever materialized.
    h = (jnp.dot(xs.astype(matmul_dtype), w1s_ref[...],
                 preferred_element_type=jnp.float32)
         + jnp.dot(xa.astype(matmul_dtype), w1a_ref[...],
                   preferred_element_type=jnp.float32)
         + b1_ref[...])
    h = jnp.maximum(h, 0.0)

    # hidden_layer (+ReLU)
    h = jnp.dot(h.astype(matmul_dtype), w2_ref[...],
                preferred_element_type=jnp.float32) + b2_ref[...]
    h = jnp.maximum(h, 0.0)

    # output_layer (H -> 1): VPU multiply + reduction (skip the skinny MXU matmul),
    # reduced over sublanes after a transpose so the result is lane-dense (1, N).
    q = jnp.sum((h * w3_ref[...]).T, axis=0, keepdims=True) + b3_ref[...]   # (1, N)
    if tanh:
        q = jnp.tanh(q)
    o_ref[0] = q.astype(o_ref.dtype)


def _mlp_forward(state_repr, action_features, mlp_params, *, normalize, tanh,
                 matmul_dtype):
    gamma, beta, w1, b1, w2, b2, w3, b3 = mlp_params
    B, Hs = state_repr.shape
    _, N, A = action_features.shape
    Hh = w1.shape[1]

    # Split the LayerNorm affine and W1 along the feature axis so the kernel never
    # needs an HBM-materialized broadcast/concat.
    gamma_s, gamma_a = gamma[:, :Hs], gamma[:, Hs:]
    beta_s, beta_a = beta[:, :Hs], beta[:, Hs:]
    w1s, w1a = w1[:Hs, :], w1[Hs:, :]
    w3_row = jnp.transpose(w3)                      # (1, Hh), f32 for the VPU path

    s3 = state_repr.reshape(B, 1, Hs).astype(jnp.float32)
    a3 = action_features.astype(jnp.float32)

    kernel = functools.partial(_mlp_kernel, normalize=normalize, tanh=tanh,
                               matmul_dtype=matmul_dtype)

    def resident(shape):
        return pl.BlockSpec(shape, lambda b: tuple(0 for _ in shape))

    out = pl.pallas_call(
        kernel,
        out_shape=jax.ShapeDtypeStruct((B, 1, N), jnp.float32),
        grid_spec=pltpu.PrefetchScalarGridSpec(
            num_scalar_prefetch=0,
            grid=(B,),
            in_specs=[
                pl.BlockSpec((1, 1, Hs), lambda b: (b, 0, 0)),   # state_repr row b
                pl.BlockSpec((1, N, A), lambda b: (b, 0, 0)),    # actions of row b
                resident((1, Hs)), resident((1, Hs)),            # LN gamma/beta (s)
                resident((1, A)), resident((1, A)),              # LN gamma/beta (a)
                resident((Hs, Hh)), resident((A, Hh)),           # W1_s, W1_a
                resident((1, Hh)),                               # b1
                resident((Hh, Hh)), resident((1, Hh)),           # W2, b2
                resident((1, Hh)), resident((1, 1)),             # w3 row, b3
            ],
            out_specs=pl.BlockSpec((1, 1, N), lambda b: (b, 0, 0)),
        ),
        compiler_params=pltpu.CompilerParams(
            dimension_semantics=("parallel",)),
    )(s3, a3, gamma_s, beta_s, gamma_a, beta_a,
      w1s.astype(matmul_dtype), w1a.astype(matmul_dtype), b1.astype(jnp.float32),
      w2.astype(matmul_dtype), b2.astype(jnp.float32),
      w3_row.astype(jnp.float32), b3.astype(jnp.float32))

    return out.reshape(B, N)


# ------------------------------ full network ---------------------------------

def lstm_network_forward(states, action_features, params, *,
                         normalize=True, tanh=True,
                         matmul_dtype=jnp.bfloat16):
    """Pallas LSTMNetwork.forward for the batched case:
       states (B, T, state_dim), action_features (B, num_actions, action_dim)
       -> q-values (B, num_actions)."""
    p = params
    h_last = _lstm_forward(states, p['ln_s_gamma'], p['ln_s_beta'],
                           p['lstm_w_ih'], p['lstm_w_hh'], p['lstm_b'],
                           normalize=normalize, matmul_dtype=matmul_dtype)
    mlp_params = (p['mlp_ln_gamma'], p['mlp_ln_beta'],
                  p['mlp_w1'], p['mlp_b1'], p['mlp_w2'], p['mlp_b2'],
                  p['mlp_w3'], p['mlp_b3'])
    return _mlp_forward(h_last, action_features, mlp_params,
                        normalize=normalize, tanh=tanh,
                        matmul_dtype=matmul_dtype)


def init_params(key, state_dim, action_dim, hidden_dim):
    """Deterministic synthetic parameters; weight matrices stored pre-transposed
       as (in, out) so kernels do x @ W without transposes."""
    S, A, H = state_dim, action_dim, hidden_dim
    din = H + A
    ks = jax.random.split(key, 9)

    def uni(k, shape, fan_in):
        bound = 1.0 / jnp.sqrt(fan_in)
        return jax.random.uniform(k, shape, jnp.float32, -bound, bound)

    return {
        # LayerNorm over LSTM state inputs (see header TODO about the spec's dim).
        'ln_s_gamma': jnp.ones((1, S), jnp.float32),
        'ln_s_beta': jnp.zeros((1, S), jnp.float32),
        # LSTM (PyTorch gate order i, f, g, o); bias is b_ih + b_hh fused.
        'lstm_w_ih': uni(ks[0], (S, 4 * H), H),
        'lstm_w_hh': uni(ks[1], (H, 4 * H), H),
        'lstm_b':    uni(ks[2], (1, 4 * H), H),
        # MLP LayerNorm over the [lstm_hidden, action] features.
        'mlp_ln_gamma': jnp.ones((1, din), jnp.float32),
        'mlp_ln_beta': jnp.zeros((1, din), jnp.float32),
        'mlp_w1': uni(ks[3], (din, H), din), 'mlp_b1': uni(ks[4], (1, H), din),
        'mlp_w2': uni(ks[5], (H, H), H),     'mlp_b2': uni(ks[6], (1, H), H),
        'mlp_w3': uni(ks[7], (H, 1), H),     'mlp_b3': uni(ks[8], (1, 1), H),
    }


# ------------------------------ pure-JAX reference ---------------------------

def _reference(states, action_features, params, *, normalize=True, tanh=True,
               matmul_dtype=jnp.float32):
    p = params

    def mm(x, w):
        return jnp.dot(x.astype(matmul_dtype), w.astype(matmul_dtype),
                       preferred_element_type=jnp.float32)

    B, T, _ = states.shape
    x = states.astype(jnp.float32)
    if normalize:
        mean = jnp.mean(x, -1, keepdims=True)
        var = jnp.mean((x - mean) ** 2, -1, keepdims=True)
        x = ((x - mean) * jax.lax.rsqrt(var + _LN_EPS)
             * p['ln_s_gamma'][0] + p['ln_s_beta'][0])

    H = p['lstm_w_hh'].shape[0]
    h = jnp.zeros((B, H), jnp.float32)
    c = jnp.zeros((B, H), jnp.float32)
    for t in range(T):
        gates = mm(x[:, t, :], p['lstm_w_ih']) + mm(h, p['lstm_w_hh']) + p['lstm_b'][0]
        i_g = jax.nn.sigmoid(gates[:, 0 * H:1 * H])
        f_g = jax.nn.sigmoid(gates[:, 1 * H:2 * H])
        g_g = jnp.tanh(gates[:, 2 * H:3 * H])
        o_g = jax.nn.sigmoid(gates[:, 3 * H:4 * H])
        c = f_g * c + i_g * g_g
        h = o_g * jnp.tanh(c)

    _, N, _ = action_features.shape
    sa = jnp.concatenate(
        [jnp.broadcast_to(h[:, None, :], (B, N, H)),
         action_features.astype(jnp.float32)], axis=-1)
    if normalize:
        mean = jnp.mean(sa, -1, keepdims=True)
        var = jnp.mean((sa - mean) ** 2, -1, keepdims=True)
        sa = ((sa - mean) * jax.lax.rsqrt(var + _LN_EPS)
              * p['mlp_ln_gamma'][0] + p['mlp_ln_beta'][0])
    h1 = jnp.maximum(mm(sa, p['mlp_w1']) + p['mlp_b1'][0], 0.0)
    h2 = jnp.maximum(mm(h1, p['mlp_w2']) + p['mlp_b2'][0], 0.0)
    q = jnp.sum(h2 * p['mlp_w3'][:, 0], axis=-1) + p['mlp_b3'][0, 0]
    if tanh:
        q = jnp.tanh(q)
    return q


if __name__ == "__main__":
    key = jax.random.PRNGKey(0)
    k_states, k_actions, k_params = jax.random.split(key, 3)

    # Small shapes consistent with the module:
    # state_dim=12, action_dim=20, hidden_dim=32, batch=2, seq_len=8, num_actions=8.
    state_dim, action_dim, hidden_dim = 12, 20, 32
    B, T, N = 2, 8, 8

    states = jax.random.normal(k_states, (B, T, state_dim), jnp.float32)
    action_features = jax.random.normal(k_actions, (B, N, action_dim), jnp.float32)
    params = init_params(k_params, state_dim, action_dim, hidden_dim)

    # Strict check: f32 MXU operands vs f32 reference.
    q_f32 = lstm_network_forward(states, action_features, params,
                                 normalize=True, tanh=True,
                                 matmul_dtype=jnp.float32)
    q_f32 = jax.block_until_ready(q_f32)
    q_ref_f32 = _reference(states, action_features, params,
                           normalize=True, tanh=True, matmul_dtype=jnp.float32)
    assert q_f32.shape == (B, N)
    assert jnp.allclose(q_f32, q_ref_f32, atol=1e-3, rtol=1e-3), \
        float(jnp.max(jnp.abs(q_f32 - q_ref_f32)))

    # Performance default: bf16 MXU operands (f32 accumulate, f32 elementwise).
    q_bf16 = lstm_network_forward(states, action_features, params,
                                  normalize=True, tanh=True,
                                  matmul_dtype=jnp.bfloat16)
    q_bf16 = jax.block_until_ready(q_bf16)
    q_ref_bf16 = _reference(states, action_features, params,
                            normalize=True, tanh=True, matmul_dtype=jnp.bfloat16)
    assert q_bf16.shape == (B, N)
    assert jnp.allclose(q_bf16, q_ref_bf16, atol=5e-3, rtol=5e-3), \
        float(jnp.max(jnp.abs(q_bf16 - q_ref_bf16)))

    print("KERNEL_OK")
</pallas_src>

<mosaic_0001>
module attributes {stable_mosaic.version = 11 : i64} {
  func.func @_lstm_kernel(%arg0: i32, %arg1: memref<1x2x12xf32, #tpu.memory_space<vmem>>, %arg2: memref<1x12xf32, #tpu.memory_space<vmem>>, %arg3: memref<1x12xf32, #tpu.memory_space<vmem>>, %arg4: memref<12x128xf32, #tpu.memory_space<vmem>>, %arg5: memref<32x128xf32, #tpu.memory_space<vmem>>, %arg6: memref<1x128xf32, #tpu.memory_space<vmem>>, %arg7: memref<2x32xf32, #tpu.memory_space<vmem>>, %arg8: memref<2x32xf32, #tpu.memory_space<vmem>>, %arg9: memref<2x32xf32, #tpu.memory_space<vmem>>) attributes {dimension_semantics = [#tpu.dimension_semantics<arbitrary>], iteration_bounds = array<i64: 8>, scalar_prefetch = 0 : i64, scratch_operands = 2 : i64, tpu.core_type = #tpu.core_type<tc>, window_params = [{transform_indices = @transform_0, window_bounds = array<i64: 1, 2, 12>}, {pipeline_mode = #tpu.pipeline_mode<synchronous>, transform_indices = @transform_1, window_bounds = array<i64: 1, 12>}, {pipeline_mode = #tpu.pipeline_mode<synchronous>, transform_indices = @transform_2, window_bounds = array<i64: 1, 12>}, {pipeline_mode = #tpu.pipeline_mode<synchronous>, transform_indices = @transform_3, window_bounds = array<i64: 12, 128>}, {pipeline_mode = #tpu.pipeline_mode<synchronous>, transform_indices = @transform_4, window_bounds = array<i64: 32, 128>}, {pipeline_mode = #tpu.pipeline_mode<synchronous>, transform_indices = @transform_5, window_bounds = array<i64: 1, 128>}, {pipeline_mode = #tpu.pipeline_mode<synchronous>, transform_indices = @transform_6, window_bounds = array<i64: 2, 32>}]} {
    %c0_i32 = arith.constant 0 : i32
    %0 = arith.cmpi eq, %arg0, %c0_i32 : i32
    %1 = arith.extui %0 : i1 to i32
    %c0_i32_0 = arith.constant 0 : i32
    %2 = arith.cmpi ne, %1, %c0_i32_0 : i32
    scf.if %2 {
      %cst_31 = arith.constant 0.000000e+00 : f32
      %69 = vector.broadcast %cst_31 : f32 to vector<2x32xf32>
      %c0_32 = arith.constant 0 : index
      %c0_33 = arith.constant 0 : index
      %70 = vector.load %arg8[%c0_32, %c0_33] : memref<2x32xf32, #tpu.memory_space<vmem>>, vector<2x32xf32>
      tpu.vector_store %arg8[%c0_32, %c0_33], %69 {strides = array<i32>} : memref<2x32xf32, #tpu.memory_space<vmem>>, vector<2x32xf32>,
      %cst_34 = arith.constant 0.000000e+00 : f32
      %71 = vector.broadcast %cst_34 : f32 to vector<2x32xf32>
      %c0_35 = arith.constant 0 : index
      %c0_36 = arith.constant 0 : index
      %72 = vector.load %arg9[%c0_35, %c0_36] : memref<2x32xf32, #tpu.memory_space<vmem>>, vector<2x32xf32>
      tpu.vector_store %arg9[%c0_35, %c0_36], %71 {strides = array<i32>} : memref<2x32xf32, #tpu.memory_space<vmem>>, vector<2x32xf32>,
    } else {
    }
    %c0 = arith.constant 0 : index
    %c0_1 = arith.constant 0 : index
    %c0_2 = arith.constant 0 : index
    %3 = vector.load %arg1[%c0, %c0_1, %c0_2] : memref<1x2x12xf32, #tpu.memory_space<vmem>>, vector<1x2x12xf32>
    %4 = vector.shape_cast %3 : vector<1x2x12xf32> to vector<2x12xf32>
    %cst = arith.constant dense<0.000000e+00> : vector<2xf32>
    %5 = vector.multi_reduction <add>, %4, %cst [1] : vector<2x12xf32> to vector<2xf32>
    %6 = vector.shape_cast %5 : vector<2xf32> to vector<2x1xf32>
    %cst_3 = arith.constant 1.200000e+01 : f32
    %7 = vector.broadcast %cst_3 : f32 to vector<2x1xf32>
    %8 = arith.divf %6, %7 : vector<2x1xf32>
    %9 = vector.broadcast %8 : vector<2x1xf32> to vector<2x12xf32>
    %10 = arith.subf %4, %9 : vector<2x12xf32>
    %11 = arith.mulf %10, %10 : vector<2x12xf32>
    %cst_4 = arith.constant dense<0.000000e+00> : vector<2xf32>
    %12 = vector.multi_reduction <add>, %11, %cst_4 [1] : vector<2x12xf32> to vector<2xf32>
    %13 = vector.shape_cast %12 : vector<2xf32> to vector<2x1xf32>
    %cst_5 = arith.constant 1.200000e+01 : f32
    %14 = vector.broadcast %cst_5 : f32 to vector<2x1xf32>
    %15 = arith.divf %13, %14 : vector<2x1xf32>
    %16 = vector.broadcast %8 : vector<2x1xf32> to vector<2x12xf32>
    %17 = arith.subf %4, %16 : vector<2x12xf32>
    %cst_6 = arith.constant 9.99999974E-6 : f32
    %18 = vector.broadcast %cst_6 : f32 to vector<2x1xf32>
    %19 = arith.addf %15, %18 : vector<2x1xf32>
    %20 = math.rsqrt %19 : vector<2x1xf32>
    %21 = vector.broadcast %20 : vector<2x1xf32> to vector<2x12xf32>
    %22 = arith.mulf %17, %21 : vector<2x12xf32>
    %c0_7 = arith.constant 0 : index
    %c0_8 = arith.constant 0 : index
    %23 = vector.load %arg2[%c0_7, %c0_8] : memref<1x12xf32, #tpu.memory_space<vmem>>, vector<1x12xf32>
    %24 = vector.broadcast %23 : vector<1x12xf32> to vector<2x12xf32>
    %25 = arith.mulf %22, %24 : vector<2x12xf32>
    %c0_9 = arith.constant 0 : index
    %c0_10 = arith.constant 0 : index
    %26 = vector.load %arg3[%c0_9, %c0_10] : memref<1x12xf32, #tpu.memory_space<vmem>>, vector<1x12xf32>
    %27 = vector.broadcast %26 : vector<1x12xf32> to vector<2x12xf32>
    %28 = arith.addf %25, %27 : vector<2x12xf32>
    %c0_11 = arith.constant 0 : index
    %c0_12 = arith.constant 0 : index
    %29 = vector.load %arg8[%c0_11, %c0_12] : memref<2x32xf32, #tpu.memory_space<vmem>>, vector<2x32xf32>
    %c0_13 = arith.constant 0 : index
    %c0_14 = arith.constant 0 : index
    %30 = vector.load %arg9[%c0_13, %c0_14] : memref<2x32xf32, #tpu.memory_space<vmem>>, vector<2x32xf32>
    %c0_15 = arith.constant 0 : index
    %c0_16 = arith.constant 0 : index
    %31 = vector.load %arg4[%c0_15, %c0_16] : memref<12x128xf32, #tpu.memory_space<vmem>>, vector<12x128xf32>
    %cst_17 = arith.constant dense<0.000000e+00> : vector<2x128xf32>
    %32 = tpu.matmul %28, %31, %cst_17 {dimension_numbers = #tpu.dot_dimension_numbers<[1], [0], [0], [1], [0, 0, 1, 1], [], []>} : vector<2x12xf32>, vector<12x128xf32>, vector<2x128xf32> -> vector<2x128xf32>
    %c0_18 = arith.constant 0 : index
    %c0_19 = arith.constant 0 : index
    %33 = vector.load %arg5[%c0_18, %c0_19] : memref<32x128xf32, #tpu.memory_space<vmem>>, vector<32x128xf32>
    %cst_20 = arith.constant dense<0.000000e+00> : vector<2x128xf32>
    %34 = tpu.matmul %29, %33, %cst_20 {dimension_numbers = #tpu.dot_dimension_numbers<[1], [0], [0], [1], [0, 0, 1, 1], [], []>} : vector<2x32xf32>, vector<32x128xf32>, vector<2x128xf32> -> vector<2x128xf32>
    %35 = arith.addf %32, %34 : vector<2x128xf32>
    %c0_21 = arith.constant 0 : index
    %c0_22 = arith.constant 0 : index
    %36 = vector.load %arg6[%c0_21, %c0_22] : memref<1x128xf32, #tpu.memory_space<vmem>>, vector<1x128xf32>
    %37 = vector.broadcast %36 : vector<1x128xf32> to vector<2x128xf32>
    %38 = arith.addf %35, %37 : vector<2x128xf32>
    %39 = vector.extract_strided_slice %38 {offsets = [0, 0], sizes = [2, 32], strides = [1, 1]} : vector<2x128xf32> to vector<2x32xf32>
    %40 = arith.negf %39 : vector<2x32xf32>
    %41 = math.exp %40 : vector<2x32xf32>
    %cst_23 = arith.constant 1.000000e+00 : f32
    %42 = vector.broadcast %cst_23 : f32 to vector<2x32xf32>
    %43 = arith.addf %42, %41 : vector<2x32xf32>
    %44 = arith.divf %42, %43 : vector<2x32xf32>
    %45 = vector.extract_strided_slice %38 {offsets = [0, 32], sizes = [2, 32], strides = [1, 1]} : vector<2x128xf32> to vector<2x32xf32>
    %46 = arith.negf %45 : vector<2x32xf32>
    %47 = math.exp %46 : vector<2x32xf32>
    %cst_24 = arith.constant 1.000000e+00 : f32
    %48 = vector.broadcast %cst_24 : f32 to vector<2x32xf32>
    %49 = arith.addf %48, %47 : vector<2x32xf32>
    %50 = arith.divf %48, %49 : vector<2x32xf32>
    %51 = vector.extract_strided_slice %38 {offsets = [0, 64], sizes = [2, 32], strides = [1, 1]} : vector<2x128xf32> to vector<2x32xf32>
    %52 = math.tanh %51 : vector<2x32xf32>
    %53 = vector.extract_strided_slice %38 {offsets = [0, 96], sizes = [2, 32], strides = [1, 1]} : vector<2x128xf32> to vector<2x32xf32>
    %54 = arith.negf %53 : vector<2x32xf32>
    %55 = math.exp %54 : vector<2x32xf32>
    %cst_25 = arith.constant 1.000000e+00 : f32
    %56 = vector.broadcast %cst_25 : f32 to vector<2x32xf32>
    %57 = arith.addf %56, %55 : vector<2x32xf32>
    %58 = arith.divf %56, %57 : vector<2x32xf32>
    %59 = arith.mulf %50, %30 : vector<2x32xf32>
    %60 = arith.mulf %44, %52 : vector<2x32xf32>
    %61 = arith.addf %59, %60 : vector<2x32xf32>
    %62 = math.tanh %61 : vector<2x32xf32>
    %63 = arith.mulf %58, %62 : vector<2x32xf32>
    %c0_26 = arith.constant 0 : index
    %c0_27 = arith.constant 0 : index
    %64 = vector.load %arg9[%c0_26, %c0_27] : memref<2x32xf32, #tpu.memory_space<vmem>>, vector<2x32xf32>
    tpu.vector_store %arg9[%c0_26, %c0_27], %61 {strides = array<i32>} : memref<2x32xf32, #tpu.memory_space<vmem>>, vector<2x32xf32>,
    %c0_28 = arith.constant 0 : index
    %c0_29 = arith.constant 0 : index
    %65 = vector.load %arg8[%c0_28, %c0_29] : memref<2x32xf32, #tpu.memory_space<vmem>>, vector<2x32xf32>
    tpu.vector_store %arg8[%c0_28, %c0_29], %63 {strides = array<i32>} : memref<2x32xf32, #tpu.memory_space<vmem>>, vector<2x32xf32>,
    %c7_i32 = arith.constant 7 : i32
    %66 = arith.cmpi eq, %arg0, %c7_i32 : i32
    %67 = arith.extui %66 : i1 to i32
    %c0_i32_30 = arith.constant 0 : i32
    %68 = arith.cmpi ne, %67, %c0_i32_30 : i32
    scf.if %68 {
      %c0_31 = arith.constant 0 : index
      %c0_32 = arith.constant 0 : index
      %69 = vector.load %arg7[%c0_31, %c0_32] : memref<2x32xf32, #tpu.memory_space<vmem>>, vector<2x32xf32>
      tpu.vector_store %arg7[%c0_31, %c0_32], %63 {strides = array<i32>} : memref<2x32xf32, #tpu.memory_space<vmem>>, vector<2x32xf32>,
    } else {
    }
    return
  }
  func.func @transform_0(%arg0: i32) -> (i32, i32, i32) {
    %c0_i32 = arith.constant 0 : i32
    %c0_i32_0 = arith.constant 0 : i32
    %c0_i32_1 = arith.constant 0 : i32
    return %arg0, %c0_i32, %c0_i32_0 : i32, i32, i32
  }
  func.func @transform_1(%arg0: i32) -> (i32, i32) {
    %c0_i32 = arith.constant 0 : i32
    %c0_i32_0 = arith.constant 0 : i32
    %c0_i32_1 = arith.constant 0 : i32
    return %c0_i32, %c0_i32_0 : i32, i32
  }
  func.func @transform_2(%arg0: i32) -> (i32, i32) {
    %c0_i32 = arith.constant 0 : i32
    %c0_i32_0 = arith.constant 0 : i32
    %c0_i32_1 = arith.constant 0 : i32
    return %c0_i32, %c0_i32_0 : i32, i32
  }
  func.func @transform_3(%arg0: i32) -> (i32, i32) {
    %c0_i32 = arith.constant 0 : i32
    %c0_i32_0 = arith.constant 0 : i32
    %c0_i32_1 = arith.constant 0 : i32
    return %c0_i32, %c0_i32_0 : i32, i32
  }
  func.func @transform_4(%arg0: i32) -> (i32, i32) {
    %c0_i32 = arith.constant 0 : i32
    %c0_i32_0 = arith.constant 0 : i32
    %c0_i32_1 = arith.constant 0 : i32
    return %c0_i32, %c0_i32_0 : i32, i32
  }
  func.func @transform_5(%arg0: i32) -> (i32, i32) {
    %c0_i32 = arith.constant 0 : i32
    %c0_i32_0 = arith.constant 0 : i32
    %c0_i32_1 = arith.constant 0 : i32
    return %c0_i32, %c0_i32_0 : i32, i32
  }
  func.func @transform_6(%arg0: i32) -> (i32, i32) {
    %c0_i32 = arith.constant 0 : i32
    %c0_i32_0 = arith.constant 0 : i32
    %c0_i32_1 = arith.constant 0 : i32
    return %c0_i32, %c0_i32_0 : i32, i32
  }
}

</mosaic_0001>

<llo_original>
// kernel: tpu_custom_call.1
$region0: #{tpu_custom_call.1}
  #allocation0 [shape = 'u32[]', space=smem, size = 0x4, offset = 0x4, fixed_abs, tag = 'smem constant byte address 0x4 - core index']
  #allocation1 [shape = 'u32[144,128]{1,0:T(1,128)}', space=vmem, size = 0x12000, scoped, tag = 'internal scratch']
  #allocation2 [shape = 'f32[2,32]{1,0:T(2,128)}', space=vmem, size = 0x400, scoped, tag = 'scratch operand']
  #allocation3 [shape = 'f32[2,32]{1,0:T(2,128)}', space=vmem, size = 0x400, scoped, tag = 'scratch operand']
  %s0 = inlined_call_operand.hbm [shape: f32[8,2,12], index: 0, kind: input, shape index: {}]
  %s1 = inlined_call_operand.vmem [shape: f32[1,12], index: 1, kind: input, shape index: {}]
  %s2 = inlined_call_operand.vmem [shape: f32[1,12], index: 2, kind: input, shape index: {}]
  %s3 = inlined_call_operand.hbm [shape: f32[12,128], index: 3, kind: input, shape index: {}]
  %s4 = inlined_call_operand.hbm [shape: f32[32,128], index: 4, kind: input, shape index: {}]
  %s5 = inlined_call_operand.vmem [shape: f32[1,128], index: 5, kind: input, shape index: {}]
  %s6 = inlined_call_operand.hbm [shape: f32[2,32], index: 6, kind: output, shape index: {}]
  %s7 = sld [smem:[#allocation0]]
  $region77: #{tpu_custom_call.1} parent=0
    _
  %s9 = ssub.s32 1, %s7
  %s10 = scalar_select 0, %s9, %s7
  $region1: #{tpu_custom_call.1} parent=0
    #allocation4 [shape = 'u8[2048]{0}', space=vmem, size = 0x800, scoped, tag = 'input window, operand 0']
    #allocation5 [shape = 's32[2]{0}', space=sflag, size = 0x8, scoped, tag = 'scoped memory for tpu_custom_call.1']
    #allocation6 [shape = 's32[2]{0}', space=sflag, size = 0x8, scoped, tag = 'scoped memory for tpu_custom_call.1']
    #allocation7 [shape = 'u8[8192]{0}', space=vmem, size = 0x2000, scoped, tag = 'input window, operand 3, single buffered']
    #allocation8 [shape = 's32[1]{0}', space=sflag, size = 0x4, scoped, tag = 'scoped memory for tpu_custom_call.1']
    #allocation9 [shape = 'u8[16384]{0}', space=vmem, size = 0x4000, scoped, tag = 'input window, operand 4, single buffered']
    #allocation10 [shape = 'u8[1024]{0}', space=vmem, size = 0x400, scoped, tag = 'output window, operand 0, single buffered']
    %11 = vsyncpa [#allocation5], 0
    %s12 = scalar_lea.sflag [#allocation5], 1
    %13 = vsyncpa %s12, 0
    %14 = vsyncpa [#allocation8], 0
    %15 = vsyncpa [#allocation6], 0
    loop: start=0, step=1, limit=10
    $region2: #{tpu_custom_call.1} parent=1 // loop_pre_header
      _
    $region3: #{tpu_custom_call.1} parent=1 // loop_header
      %s17 = sphi 0, %s21
      %p18 = scmp.ge.s32.totalorder %s17, 10
      %s27 = sphi 0, %s29
      %s30 = sphi 0, %s27
      %s31 = sphi 0, %s30
      %s47 = sphi 0, %s31
      %s51 = sphi 0, %s51
      %s53 = sphi 0, %s51
      %s54 = sphi 0, %s53
      %s68 = sphi 0, %s54
      %s72 = sphi 0, %s72
      %s74 = sphi 0, %s72
      %s75 = sphi 0, %s74
      %s89 = sphi 0, %s75
      %s93 = sphi 0, %s93
      %s95 = sphi 0, %s93
      %s96 = sphi 0, %s95
      %s110 = sphi 0, %s96
      %s114 = sphi 0, %s114
      %s116 = sphi 0, %s114
      %s117 = sphi 0, %s116
      %s131 = sphi 0, %s117
      %s135 = sphi 0, %s135
      %s137 = sphi 0, %s135
      %s138 = sphi 0, %s137
      %s152 = sphi 0, %s138
      %s156 = sphi 0, %s156
      %s158 = sphi 0, %s156
      %s159 = sphi 0, %s158
      %s173 = sphi 0, %s159
    $region4: #{tpu_custom_call.1} parent=1 // loop_header_branch
      %20 = sbr.rel (%p18) target = $region8
    $region5: #{tpu_custom_call.1} parent=1 // loop_body
      %s22 = ssub.s32 %s17, 1
      %s23 = ssub.s32 %s17, 2
      %s24 = sadd.s32 %s17, 1
      %s25 = ssub.s32 %s17, %s24
      %p26 = scmp.eq.s32.totalorder %s25, 0
      %s28 = sadd.s32 %s27, 1
      %s29 = scalar_select %p26, %s27, %s28
      %p32 = pneg %p26
      %p33 = scmp.eq.s32.totalorder %s17, 7
      %p34 = por %p32, %p33
      %p35 = scmp.ne.s32.totalorder %s27, %s30
      %p36 = scmp.eq.s32.totalorder %s17, 0
      %p37 = por %p35, %p36
      %p38 = scmp.ne.s32.totalorder %s27, %s30
      %p39 = scmp.eq.s32.totalorder %s22, 7
      %p40 = por %p38, %p39
      %p41 = scmp.ne.s32.totalorder %s30, %s31
      %p42 = scmp.eq.s32.totalorder %s22, 0
      %p43 = por %p41, %p42
      %p44 = scmp.ne.s32.totalorder %s30, %s31
      %p45 = scmp.eq.s32.totalorder %s23, 7
      %p46 = por %p44, %p45
      %p48 = scmp.ne.s32.totalorder %s31, %s47
      %p49 = scmp.eq.s32.totalorder %s23, 0
      %p50 = por %p48, %p49
      %s52 = sadd.s32 %s51, 1
      %p55 = scmp.eq.s32.totalorder %s17, 7
      %p56 = scmp.ne.s32.totalorder %s51, %s53
      %p57 = scmp.eq.s32.totalorder %s17, 0
      %p58 = por %p56, %p57
      %p59 = scmp.ne.s32.totalorder %s51, %s53
      %p60 = scmp.eq.s32.totalorder %s22, 7
      %p61 = por %p59, %p60
      %p62 = scmp.ne.s32.totalorder %s53, %s54
      %p63 = scmp.eq.s32.totalorder %s22, 0
      %p64 = por %p62, %p63
      %p65 = scmp.ne.s32.totalorder %s53, %s54
      %p66 = scmp.eq.s32.totalorder %s23, 7
      %p67 = por %p65, %p66
      %p69 = scmp.ne.s32.totalorder %s54, %s68
      %p70 = scmp.eq.s32.totalorder %s23, 0
      %p71 = por %p69, %p70
      %s73 = sadd.s32 %s72, 1
      %p76 = scmp.eq.s32.totalorder %s17, 7
      %p77 = scmp.ne.s32.totalorder %s72, %s74
      %p78 = scmp.eq.s32.totalorder %s17, 0
      %p79 = por %p77, %p78
      %p80 = scmp.ne.s32.totalorder %s72, %s74
      %p81 = scmp.eq.s32.totalorder %s22, 7
      %p82 = por %p80, %p81
      %p83 = scmp.ne.s32.totalorder %s74, %s75
      %p84 = scmp.eq.s32.totalorder %s22, 0
      %p85 = por %p83, %p84
      %p86 = scmp.ne.s32.totalorder %s74, %s75
      %p87 = scmp.eq.s32.totalorder %s23, 7
      %p88 = por %p86, %p87
      %p90 = scmp.ne.s32.totalorder %s75, %s89
      %p91 = scmp.eq.s32.totalorder %s23, 0
      %p92 = por %p90, %p91
      %s94 = sadd.s32 %s93, 1
      %p97 = scmp.eq.s32.totalorder %s17, 7
      %p98 = scmp.ne.s32.totalorder %s93, %s95
      %p99 = scmp.eq.s32.totalorder %s17, 0
      %p100 = por %p98, %p99
      %p101 = scmp.ne.s32.totalorder %s93, %s95
      %p102 = scmp.eq.s32.totalorder %s22, 7
      %p103 = por %p101, %p102
      %p104 = scmp.ne.s32.totalorder %s95, %s96
      %p105 = scmp.eq.s32.totalorder %s22, 0
      %p106 = por %p104, %p105
      %p107 = scmp.ne.s32.totalorder %s95, %s96
      %p108 = scmp.eq.s32.totalorder %s23, 7
      %p109 = por %p107, %p108
      %p111 = scmp.ne.s32.totalorder %s96, %s110
      %p112 = scmp.eq.s32.totalorder %s23, 0
      %p113 = por %p111, %p112
      %s115 = sadd.s32 %s114, 1
      %p118 = scmp.eq.s32.totalorder %s17, 7
      %p119 = scmp.ne.s32.totalorder %s114, %s116
      %p120 = scmp.eq.s32.totalorder %s17, 0
      %p121 = por %p119, %p120
      %p122 = scmp.ne.s32.totalorder %s114, %s116
      %p123 = scmp.eq.s32.totalorder %s22, 7
      %p124 = por %p122, %p123
      %p125 = scmp.ne.s32.totalorder %s116, %s117
      %p126 = scmp.eq.s32.totalorder %s22, 0
      %p127 = por %p125, %p126
      %p128 = scmp.ne.s32.totalorder %s116, %s117
      %p129 = scmp.eq.s32.totalorder %s23, 7
      %p130 = por %p128, %p129
      %p132 = scmp.ne.s32.totalorder %s117, %s131
      %p133 = scmp.eq.s32.totalorder %s23, 0
      %p134 = por %p132, %p133
      %s136 = sadd.s32 %s135, 1
      %p139 = scmp.eq.s32.totalorder %s17, 7
      %p140 = scmp.ne.s32.totalorder %s135, %s137
      %p141 = scmp.eq.s32.totalorder %s17, 0
      %p142 = por %p140, %p141
      %p143 = scmp.ne.s32.totalorder %s135, %s137
      %p144 = scmp.eq.s32.totalorder %s22, 7
      %p145 = por %p143, %p144
      %p146 = scmp.ne.s32.totalorder %s137, %s138
      %p147 = scmp.eq.s32.totalorder %s22, 0
      %p148 = por %p146, %p147
      %p149 = scmp.ne.s32.totalorder %s137, %s138
      %p150 = scmp.eq.s32.totalorder %s23, 7
      %p151 = por %p149, %p150
      %p153 = scmp.ne.s32.totalorder %s138, %s152
      %p154 = scmp.eq.s32.totalorder %s23, 0
      %p155 = por %p153, %p154
      %s157 = sadd.s32 %s156, 1
      %p160 = scmp.eq.s32.totalorder %s17, 7
      %p161 = scmp.ne.s32.totalorder %s156, %s158
      %p162 = scmp.eq.s32.totalorder %s17, 0
      %p163 = por %p161, %p162
      %p164 = scmp.ne.s32.totalorder %s156, %s158
      %p165 = scmp.eq.s32.totalorder %s22, 7
      %p166 = por %p164, %p165
      %p167 = scmp.ne.s32.totalorder %s158, %s159
      %p168 = scmp.eq.s32.totalorder %s22, 0
      %p169 = por %p167, %p168
      %p170 = scmp.ne.s32.totalorder %s158, %s159
      %p171 = scmp.eq.s32.totalorder %s23, 7
      %p172 = por %p170, %p171
      %p174 = scmp.ne.s32.totalorder %s159, %s173
      %p175 = scmp.eq.s32.totalorder %s23, 0
      %p176 = por %p174, %p175
      %p177 = scmp.le.s32.totalorder 1, %s17
      %p178 = scmp.lt.s32.totalorder %s17, 9
      %p179 = pnand %p177, %p178
      %p180 = pneg %p179
      // Predicated region
      $region9: #{tpu_custom_call.1} parent=5 // pred_check
        _
      $region10: #{tpu_custom_call.1} parent=5 // pred_check_branch
        %182 = sbr.rel (%p179) target = $region12
      $region11: #{tpu_custom_call.1} parent=5 // pred_region
        %s183 = ssub.s32 %s17, 1
        // Predicated region
        $region13: #{tpu_custom_call.1} parent=11 // pred_check
          %p184 = pneg %p64
        $region14: #{tpu_custom_call.1} parent=11 // pred_check_branch
          %186 = sbr.rel (%p184) target = $region16
        $region15: #{tpu_custom_call.1} parent=11 // pred_region
          _
        $region16: #{tpu_custom_call.1} parent=11 // pred_fallthru
          _
        // Predicated region
        $region17: #{tpu_custom_call.1} parent=11 // pred_check
          %p187 = pneg %p85
        $region18: #{tpu_custom_call.1} parent=11 // pred_check_branch
          %189 = sbr.rel (%p187) target = $region20
        $region19: #{tpu_custom_call.1} parent=11 // pred_region
          _
        $region20: #{tpu_custom_call.1} parent=11 // pred_fallthru
          _
        // Predicated region
        $region21: #{tpu_custom_call.1} parent=11 // pred_check
          %p190 = pneg %p106
        $region22: #{tpu_custom_call.1} parent=11 // pred_check_branch
          %192 = sbr.rel (%p190) target = $region24
        $region23: #{tpu_custom_call.1} parent=11 // pred_region
          %s194 = ssub.s32 256, 256
          %195 = vsyncadd [#allocation8], %s194
          %s196 = sshll.u32 [#allocation7], 4
          %s197 = int_to_ptr.vmem [resolvable:$true] %s196
          %202 = dma.hbm_to_vmem [thread:$0]  %s3, 256, %s197, [#allocation8], 128, 128, 8
        $region24: #{tpu_custom_call.1} parent=11 // pred_fallthru
          _
        // Predicated region
        $region25: #{tpu_custom_call.1} parent=11 // pred_check
          %p203 = pneg %p127
        $region26: #{tpu_custom_call.1} parent=11 // pred_check_branch
          %205 = sbr.rel (%p203) target = $region28
        $region27: #{tpu_custom_call.1} parent=11 // pred_region
          %s207 = ssub.s32 512, 512
          %208 = vsyncadd [#allocation8], %s207
          %s209 = sshll.u32 [#allocation9], 4
          %s210 = int_to_ptr.vmem [resolvable:$true] %s209
          %215 = dma.hbm_to_vmem [thread:$0]  %s4, 512, %s210, [#allocation8], 128, 128, 8
        $region28: #{tpu_custom_call.1} parent=11 // pred_fallthru
          _
        // Predicated region
        $region29: #{tpu_custom_call.1} parent=11 // pred_check
          %p216 = pneg %p148
        $region30: #{tpu_custom_call.1} parent=11 // pred_check_branch
          %218 = sbr.rel (%p216) target = $region32
        $region31: #{tpu_custom_call.1} parent=11 // pred_region
          _
        $region32: #{tpu_custom_call.1} parent=11 // pred_fallthru
          _
      $region12: #{tpu_custom_call.1} parent=5 // pred_fallthru
        _
      %p219 = scmp.lt.s32.totalorder %s17, 8
      // Predicated region
      $region33: #{tpu_custom_call.1} parent=5 // pred_check
        %p220 = pneg %p219
      $region34: #{tpu_custom_call.1} parent=5 // pred_check_branch
        %222 = sbr.rel (%p220) target = $region36
      $region35: #{tpu_custom_call.1} parent=5 // pred_region
        // Predicated region
        $region37: #{tpu_custom_call.1} parent=35 // pred_check
          %p223 = pneg %p37
        $region38: #{tpu_custom_call.1} parent=35 // pred_check_branch
          %225 = sbr.rel (%p223) target = $region40
        $region39: #{tpu_custom_call.1} parent=35 // pred_region
          %s226 = sand.u32 %s27, 1
          %s227 = scalar_lea.sflag [#allocation5], %s226
          %s228 = sand.u32 %s27, 1
          %s229 = smul.addr %s228, 2
          %s230 = scalar_lea.vmem [#allocation4], %s229
          %s232 = ssub.s32 32, 32
          %233 = vsyncadd %s227, %s232
          %s234 = smul.addr %s17, 32
          %s235 = scalar_lea.hbm %s0, %s234
          %s237 = sshll.u32 %s230, 4
          %s238 = int_to_ptr.vmem [resolvable:$true] %s237
          %240 = dma.hbm_to_vmem [thread:$0]  %s235, 32, %s238, %s227
        $region40: #{tpu_custom_call.1} parent=35 // pred_fallthru
          _
      $region36: #{tpu_custom_call.1} parent=5 // pred_fallthru
        _
      %p241 = scmp.le.s32.totalorder 1, %s17
      %p242 = scmp.lt.s32.totalorder %s17, 9
      %p243 = pnand %p241, %p242
      %p244 = pneg %p243
      // Predicated region
      $region41: #{tpu_custom_call.1} parent=5 // pred_check
        _
      $region42: #{tpu_custom_call.1} parent=5 // pred_check_branch
        %246 = sbr.rel (%p243) target = $region44
      $region43: #{tpu_custom_call.1} parent=5 // pred_region
        %s247 = ssub.s32 %s17, 1
        %s248 = sand.u32 %s30, 1
        %s249 = scalar_lea.sflag [#allocation5], %s248
        %s250 = sand.u32 %s30, 1
        %s251 = smul.addr %s250, 2
        %s252 = scalar_lea.vmem [#allocation4], %s251
        // Predicated region
        $region45: #{tpu_custom_call.1} parent=43 // pred_check
          %p253 = pneg %p43
        $region46: #{tpu_custom_call.1} parent=43 // pred_check_branch
          %255 = sbr.rel (%p253) target = $region48
        $region47: #{tpu_custom_call.1} parent=43 // pred_region
          %256 = dma.done %s249, 32
        $region48: #{tpu_custom_call.1} parent=43 // pred_fallthru
          _
        // Predicated region
        $region49: #{tpu_custom_call.1} parent=43 // pred_check
          %p257 = pneg %p106
        $region50: #{tpu_custom_call.1} parent=43 // pred_check_branch
          %259 = sbr.rel (%p257) target = $region52
        $region51: #{tpu_custom_call.1} parent=43 // pred_region
          %260 = dma.done [#allocation8], 256
        $region52: #{tpu_custom_call.1} parent=43 // pred_fallthru
          _
        // Predicated region
        $region53: #{tpu_custom_call.1} parent=43 // pred_check
          %p261 = pneg %p127
        $region54: #{tpu_custom_call.1} parent=43 // pred_check_branch
          %263 = sbr.rel (%p261) target = $region56
        $region55: #{tpu_custom_call.1} parent=43 // pred_region
          %264 = dma.done [#allocation8], 512
        $region56: #{tpu_custom_call.1} parent=43 // pred_fallthru
          _
        %s265 = sand.u32 %s30, 1
        %s266 = scalar_lea.sflag [#allocation5], %s265
        %s267 = sand.u32 %s30, 1
        %s268 = smul.addr %s267, 2
        %s269 = scalar_lea.vmem [#allocation4], %s268
        %p270 = pneg %p43
        %p271 = pneg %p40
        %p272 = pneg %p64
        %p273 = pneg %p61
        %p274 = pneg %p85
        %p275 = pneg %p82
        %p276 = pneg %p106
        %p277 = pneg %p103
        %p278 = pneg %p127
        %p279 = pneg %p124
        %p280 = pneg %p148
        %p281 = pneg %p145
        %p282 = pneg %p169
        %p283 = pneg %p166
        %p284 = scmp.eq.s32.totalorder %s22, 0
        // Predicated region
        $region57: #{tpu_custom_call.1} parent=43 // pred_check
          %p285 = pneg %p284
        $region58: #{tpu_custom_call.1} parent=43 // pred_check_branch
          %287 = sbr.rel (%p285) target = $region60
        $region59: #{tpu_custom_call.1} parent=43 // pred_region
          %vm288 = vcmask 254976
          %289 = vst.msk [vmem:[#allocation2] sm:$0x3] %vm288, 0.0
          %290 = vst.msk [vmem:[#allocation3] sm:$0x3] %vm288, 0.0
        $region60: #{tpu_custom_call.1} parent=43 // pred_fallthru
          _
        %v291 = vld [vmem:[%s252] sm:$0x3]
        %vm292 = vcmask 91136
        %v293 = vsel %vm292, %v291, 0.0
        %294 = vadd.xlane.f32.xlu0 %v293
        %v295 = vpop.xlane.xlu0 %294
        %v296 = vrcp.pop 12.0
        %v297 = vmul.f32 %v295, %v296
        %v298 = vsub.f32 %v291, %v297
        %v299 = vmul.f32 %v298, %v298
        %v300 = vsel %vm292, %v299, 0.0
        %301 = vadd.xlane.f32.xlu0 %v300
        %v302 = vpop.xlane.xlu0 %301
        %v303 = vmul.f32 %v302, %v296
        %v304 = vadd.f32 %v303, 1e-05
        %v305 = vrsqrt.pop %v304
        %v306 = vmul.f32 %v298, %v305
        %v307 = vld [vmem:[%s1] sm:$0x1]
        %v309 = vlaneseq
        %v310 = vshrl.u32 %v309, 7
        %v311 = vsub.s32 0, %v310
        %v312 = vrot.slane %v307, %v311
        %v314 = vmul.f32 %v306, %v312
        %v315 = vld [vmem:[%s2] sm:$0x1]
        %v317 = vlaneseq
        %v318 = vshrl.u32 %v317, 7
        %v319 = vsub.s32 0, %v318
        %v320 = vrot.slane %v315, %v319
        %v322 = vadd.f32 %v314, %v320
        %v323 = vld [vmem:[#allocation2] sm:$0x3]
        %v324 = vld [vmem:[#allocation3] sm:$0x3]
        %v325 = vld [vmem:[#allocation7] sm:$0xff]
        %v326 = vld [vmem:[#allocation7 + $0x8] sm:$0xf]
        %v327 = vld [vmem:[#allocation9] sm:$0xff]
        %v328 = vld [vmem:[#allocation9 + $0x8] sm:$0xff]
        %v329 = vld [vmem:[#allocation9 + $0x10] sm:$0xff]
        %v330 = vld [vmem:[#allocation9 + $0x18] sm:$0xff]
        %vm331 = vcmask 261120
        %v333 = vsel %vm331, %v323, 0
        %335 = vmatprep.subr.mxu0 0.0
        %336 = vmatpush1.msra.mxu0 %v327
        %337 = vmatprep.subr.mxu0 0.0
        %338 = vmatpush1.msra.mxu0 %v328
        %339 = vmatprep.subr.mxu0 0.0
        %340 = vmatpush1.msra.mxu0 %v329
        %341 = vmatprep.subr.mxu0 0.0
        %342 = vmatpush1.msra.mxu0 %v330
        %343 = vmatprep.subr.mxu0 0.0
        %344 = vmatpush1.msra.mxu0 0.0
        %345 = vmatprep.subr.mxu0 0.0
        %346 = vmatpush1.msra.mxu0 0.0
        %347 = vmatprep.subr.mxu0 0.0
        %348 = vmatpush1.msra.mxu0 0.0
        %349 = vmatprep.subr.mxu0 0.0
        %350 = vmatpush1.msra.mxu0 0.0
        %351 = vmatprep.subr.mxu0 0.0
        %352 = vmatpush1.msra.mxu0 0.0
        %353 = vmatprep.subr.mxu0 0.0
        %354 = vmatpush1.msra.mxu0 0.0
        %355 = vmatprep.subr.mxu0 0.0
        %356 = vmatpush1.msra.mxu0 0.0
        %357 = vmatprep.subr.mxu0 0.0
        %358 = vmatpush1.msra.mxu0 0.0
        %359 = vmatprep.subr.mxu0 0.0
        %360 = vmatpush1.msra.mxu0 0.0
        %361 = vmatprep.subr.mxu0 0.0
        %362 = vmatpush1.msra.mxu0 0.0
        %363 = vmatprep.subr.mxu0 0.0
        %364 = vmatpush1.msra.mxu0 0.0
        %365 = vmatprep.subr.mxu0 0.0
        %366 = vmatpush1.msra.mxu0 0.0
        %367 = vmatprep.subr.mxu0 0.0
        %368 = vmatpush1.msra.mxu0 0.0
        %369 = vmatprep.subr.mxu0 0.0
        %370 = vmatpush1.msra.mxu0 0.0
        %371 = vmatprep.subr.mxu0 0.0
        %372 = vmatpush1.msra.mxu0 0.0
        %373 = vmatprep.subr.mxu0 0.0
        %374 = vmatpush1.msra.mxu0 0.0
        %375 = vmatprep.subr.mxu0 0.0
        %376 = vmatpush1.msra.mxu0 0.0
        %377 = vmatprep.subr.mxu0 0.0
        %378 = vmatpush1.msra.mxu0 0.0
        %379 = vmatprep.subr.mxu0 0.0
        %380 = vmatpush1.msra.mxu0 0.0
        %381 = vmatprep.subr.mxu0 0.0
        %382 = vmatpush1.msra.mxu0 0.0
        %383 = vmatprep.subr.mxu0 0.0
        %384 = vmatpush1.msra.mxu0 0.0
        %385 = vmatprep.subr.mxu0 0.0
        %386 = vmatpush1.msra.mxu0 0.0
        %387 = vmatprep.subr.mxu0 0.0
        %388 = vmatpush1.msra.mxu0 0.0
        %389 = vmatprep.subr.mxu0 0.0
        %390 = vmatpush1.msra.mxu0 0.0
        %391 = vmatprep.subr.mxu0 0.0
        %392 = vmatpush1.msra.mxu0 0.0
        %393 = vmatprep.subr.mxu0 0.0
        %394 = vmatpush1.msra.mxu0 0.0
        %395 = vmatprep.subr.mxu0 0.0
        %396 = vmatpush1.msra.mxu0 0.0
        %397 = vmatprep.subr.mxu0 0.0
        %398 = vmatpush1.msra.mxu0 0.0
        %399 = vmatprep.mubr.f32.mxu0 0.0
        %400 = vmatmul.mubr.f32.gmra.mrb[0].mxu0 %v333
        %v401 = vpop.f32.mrb[0].mxu0
        %v402 = vadd.f32 0.0, %v401
        %v403 = vpop.f32.mrb[0].mxu0
        %404 = vdwg.mxu0
        %vm405 = vcmask 97280
        %v407 = vsel %vm405, %v322, 0
        %vm409 = vcmask 1043456
        %v411 = vsel %vm409, %v326, 0
        %413 = vmatprep.subr.mxu0 0.0
        %414 = vmatpush1.msra.mxu0 %v325
        %415 = vmatprep.subr.mxu0 0.0
        %416 = vmatpush1.msra.mxu0 %v411
        %417 = vmatprep.subr.mxu0 0.0
        %418 = vmatpush1.msra.mxu0 0.0
        %419 = vmatprep.subr.mxu0 0.0
        %420 = vmatpush1.msra.mxu0 0.0
        %421 = vmatprep.subr.mxu0 0.0
        %422 = vmatpush1.msra.mxu0 0.0
        %423 = vmatprep.subr.mxu0 0.0
        %424 = vmatpush1.msra.mxu0 0.0
        %425 = vmatprep.subr.mxu0 0.0
        %426 = vmatpush1.msra.mxu0 0.0
        %427 = vmatprep.subr.mxu0 0.0
        %428 = vmatpush1.msra.mxu0 0.0
        %429 = vmatprep.subr.mxu0 0.0
        %430 = vmatpush1.msra.mxu0 0.0
        %431 = vmatprep.subr.mxu0 0.0
        %432 = vmatpush1.msra.mxu0 0.0
        %433 = vmatprep.subr.mxu0 0.0
        %434 = vmatpush1.msra.mxu0 0.0
        %435 = vmatprep.subr.mxu0 0.0
        %436 = vmatpush1.msra.mxu0 0.0
        %437 = vmatprep.subr.mxu0 0.0
        %438 = vmatpush1.msra.mxu0 0.0
        %439 = vmatprep.subr.mxu0 0.0
        %440 = vmatpush1.msra.mxu0 0.0
        %441 = vmatprep.subr.mxu0 0.0
        %442 = vmatpush1.msra.mxu0 0.0
        %443 = vmatprep.subr.mxu0 0.0
        %444 = vmatpush1.msra.mxu0 0.0
        %445 = vmatprep.subr.mxu0 0.0
        %446 = vmatpush1.msra.mxu0 0.0
        %447 = vmatprep.subr.mxu0 0.0
        %448 = vmatpush1.msra.mxu0 0.0
        %449 = vmatprep.subr.mxu0 0.0
        %450 = vmatpush1.msra.mxu0 0.0
        %451 = vmatprep.subr.mxu0 0.0
        %452 = vmatpush1.msra.mxu0 0.0
        %453 = vmatprep.subr.mxu0 0.0
        %454 = vmatpush1.msra.mxu0 0.0
        %455 = vmatprep.subr.mxu0 0.0
        %456 = vmatpush1.msra.mxu0 0.0
        %457 = vmatprep.subr.mxu0 0.0
        %458 = vmatpush1.msra.mxu0 0.0
        %459 = vmatprep.subr.mxu0 0.0
        %460 = vmatpush1.msra.mxu0 0.0
        %461 = vmatprep.subr.mxu0 0.0
        %462 = vmatpush1.msra.mxu0 0.0
        %463 = vmatprep.subr.mxu0 0.0
        %464 = vmatpush1.msra.mxu0 0.0
        %465 = vmatprep.subr.mxu0 0.0
        %466 = vmatpush1.msra.mxu0 0.0
        %467 = vmatprep.subr.mxu0 0.0
        %468 = vmatpush1.msra.mxu0 0.0
        %469 = vmatprep.subr.mxu0 0.0
        %470 = vmatpush1.msra.mxu0 0.0
        %471 = vmatprep.subr.mxu0 0.0
        %472 = vmatpush1.msra.mxu0 0.0
        %473 = vmatprep.subr.mxu0 0.0
        %474 = vmatpush1.msra.mxu0 0.0
        %475 = vmatprep.subr.mxu0 0.0
        %476 = vmatpush1.msra.mxu0 0.0
        %477 = vmatprep.mubr.f32.mxu0 0.0
        %478 = vmatmul.mubr.f32.gmra.mrb[0].mxu0 %v407
        %v479 = vpop.f32.mrb[0].mxu0
        %v480 = vadd.f32 %v402, %v479
        %v481 = vpop.f32.mrb[0].mxu0
        %482 = vdwg.mxu0
        %v483 = vld [vmem:[%s5] sm:$0x1]
        %v485 = vlaneseq
        %v486 = vshrl.u32 %v485, 7
        %v487 = vsub.s32 0, %v486
        %v488 = vrot.slane %v483, %v487
        %v490 = vadd.f32 %v480, %v488
        %v491 = vxor.u32 %v490, 2147483648
        %v492 = vmul.f32 %v491, 1.442695
        %v493 = vpow.pop %v492
        %v494 = vadd.f32 %v493, 1.0
        %v495 = vrcp.pop %v494
        %v496 = vmul.f32 1.0, %v495
        %v497 = vtanh.pop %v490
        %499 = vrot.lane.b32.xlu0 %v324, 32
        %v500 = vpop.permute.xlu0 %499
        %v502 = vmul.f32 %v496, %v500
        %504 = vrot.lane.b32.xlu0 %v497, 64
        %v505 = vpop.permute.xlu0 %504
        %v507 = vmul.f32 %v496, %v505
        %509 = vrot.lane.b32.xlu0 %v507, 32
        %v510 = vpop.permute.xlu0 %509
        %v512 = vadd.f32 %v502, %v510
        %v513 = vtanh.pop %v512
        %515 = vrot.lane.b32.xlu0 %v513, 64
        %v516 = vpop.permute.xlu0 %515
        %v518 = vmul.f32 %v496, %v516
        %520 = vrot.lane.b32.xlu0 %v512, 96
        %v521 = vpop.permute.xlu0 %520
        %vm523 = vcmask 254976
        %524 = vst.msk [vmem:[#allocation3] sm:$0x3] %vm523, %v521
        %526 = vrot.lane.b32.xlu0 %v518, 32
        %v527 = vpop.permute.xlu0 %526
        %529 = vst.msk [vmem:[#allocation2] sm:$0x3] %vm523, %v527
        %p530 = scmp.eq.s32.totalorder %s22, 7
        // Predicated region
        $region61: #{tpu_custom_call.1} parent=43 // pred_check
          %p531 = pneg %p530
        $region62: #{tpu_custom_call.1} parent=43 // pred_check_branch
          %533 = sbr.rel (%p531) target = $region64
        $region63: #{tpu_custom_call.1} parent=43 // pred_region
          %534 = vst.msk [vmem:[#allocation10] sm:$0x3] %vm523, %v527
        $region64: #{tpu_custom_call.1} parent=43 // pred_fallthru
          _
        // Predicated region
        $region65: #{tpu_custom_call.1} parent=43 // pred_check
          %p535 = pneg %p166
        $region66: #{tpu_custom_call.1} parent=43 // pred_check_branch
          %537 = sbr.rel (%p535) target = $region68
        $region67: #{tpu_custom_call.1} parent=43 // pred_region
          %s539 = ssub.s32 32, 32
          %540 = vsyncadd [#allocation6], %s539
          %s542 = sshll.u32 [#allocation10], 4
          %s543 = int_to_ptr.vmem [resolvable:$true] %s542
          %545 = dma.vmem_to_hbm [thread:$0]  %s543, 32, %s6, [#allocation6]
        $region68: #{tpu_custom_call.1} parent=43 // pred_fallthru
          _
        // Predicated region
        $region69: #{tpu_custom_call.1} parent=43 // pred_check
          %p546 = pneg %p166
        $region70: #{tpu_custom_call.1} parent=43 // pred_check_branch
          %548 = sbr.rel (%p546) target = $region72
        $region71: #{tpu_custom_call.1} parent=43 // pred_region
          %549 = dma.done [#allocation6], 32
        $region72: #{tpu_custom_call.1} parent=43 // pred_fallthru
          _
      $region44: #{tpu_custom_call.1} parent=5 // pred_fallthru
        _
      %p550 = scmp.le.s32.totalorder 2, %s17
      // Predicated region
      $region73: #{tpu_custom_call.1} parent=5 // pred_check
        %p551 = pneg %p550
      $region74: #{tpu_custom_call.1} parent=5 // pred_check_branch
        %553 = sbr.rel (%p551) target = $region76
      $region75: #{tpu_custom_call.1} parent=5 // pred_region
        %s554 = ssub.s32 %s17, 2
      $region76: #{tpu_custom_call.1} parent=5 // pred_fallthru
        _
    $region6: #{tpu_custom_call.1} parent=1 // loop_footer
      %s21 = sadd.s32 1, %s17
    $region7: #{tpu_custom_call.1} parent=1 // loop_footer_branch
      %16 = sbr.rel target = $region3
    $region8: #{tpu_custom_call.1} parent=1 // loop_exit
      _
    %555 = vsyncpa [#allocation5], 1
    %s556 = scalar_lea.sflag [#allocation5], 1
    %557 = vsyncpa %s556, 1
    %558 = vsyncpa [#allocation8], 1
    %559 = vsyncpa [#allocation6], 1
    %s560 = scalar_lea.sflag [#allocation6], 1
    %561 = vsyncpa %s560, 1

</llo_original>
